<compile_context>
chip_gen: v5e
topology: v5e:2x2
jax: 0.10.0
libtpu: 0.0.40
codegen_flags: <defaults>
</compile_context>

<pallas_src>
import jax
import jax.numpy as jnp
from jax.experimental import pallas as pl
from jax.experimental.pallas import tpu as pltpu

_LANE = 128
_SUBLANE = 8


def _policy_mlp_kernel(x_ref, w1_ref, b1_ref, w2_ref, b2_ref, o_ref):
    # Two MXU matmuls + VPU bias-add / ReLU, fused in one kernel body.
    x = x_ref[...]
    h = jnp.dot(x, w1_ref[...], preferred_element_type=jnp.float32) + b1_ref[...]
    h = jnp.maximum(h, 0.0)                                     # ReLU
    y = jnp.dot(h, w2_ref[...], preferred_element_type=jnp.float32) + b2_ref[...]
    o_ref[...] = y.astype(o_ref.dtype)


def _round_up(x, m):
    return ((x + m - 1) // m) * m


def policy_forward(state, w1, b1, w2, b2, *, block_b=512):
    """relu(state @ w1 + b1) @ w2 + b2 as a single Pallas TPU kernel.

    state: (B, input_dim) f32
    w1: (input_dim, hidden_dim), b1: (1, hidden_dim)
    w2: (hidden_dim, output_dim), b2: (1, output_dim)
    Returns (B, output_dim) f32.
    """
    B, input_dim = state.shape
    hidden_dim = w1.shape[1]
    output_dim = w2.shape[1]

    # --- Lane-dense output: pad output feature axis to a multiple of 128 so
    # the kernel writes full-lane (unmasked) stores; slice back in the wrapper.
    out_pad = _round_up(output_dim, _LANE)
    if out_pad != output_dim:
        w2p = jnp.zeros((hidden_dim, out_pad), w2.dtype).at[:, :output_dim].set(w2)
        b2p = jnp.zeros((1, out_pad), b2.dtype).at[:, :output_dim].set(b2)
    else:
        w2p, b2p = w2, b2

    # --- Batch tiling: whole batch in one step when small, else tile over B
    # with resident weights.
    if B <= block_b:
        tb = B                      # block == full array (legal even if <8 rows)
        b_pad = B
    else:
        tb = max(_SUBLANE, (block_b // _SUBLANE) * _SUBLANE)
        b_pad = _round_up(B, tb)

    # --- VMEM budget: double-buffered state/out tiles + (double-buffered)
    # weights. Target <=32 MiB so the same tile is safe on v7x (64 MiB VMEM).
    def vmem_bytes(t):
        tile_io = 2 * (t * input_dim + t * out_pad) * 4
        weights = 2 * (input_dim * hidden_dim + hidden_dim
                       + hidden_dim * out_pad + out_pad) * 4
        return tile_io + weights

    while B > block_b and vmem_bytes(tb) > 32 * 1024 * 1024 and tb > _SUBLANE:
        tb //= 2
        b_pad = _round_up(B, tb)

    state_p = state
    if b_pad != B:
        state_p = jnp.zeros((b_pad, input_dim), state.dtype).at[:B, :].set(state)

    grid = (b_pad // tb,)

    flops = 2 * b_pad * (input_dim * hidden_dim + hidden_dim * out_pad)
    bytes_accessed = (
        b_pad * input_dim * 4
        + (input_dim * hidden_dim + hidden_dim + hidden_dim * out_pad + out_pad) * 4
        + b_pad * out_pad * 4
    )

    out_p = pl.pallas_call(
        _policy_mlp_kernel,
        out_shape=jax.ShapeDtypeStruct((b_pad, out_pad), jnp.float32),
        grid=grid,
        in_specs=[
            pl.BlockSpec((tb, input_dim), lambda i: (i, 0)),          # batch-tiled
            pl.BlockSpec((input_dim, hidden_dim), lambda i: (0, 0)),  # resident
            pl.BlockSpec((1, hidden_dim), lambda i: (0, 0)),          # resident
            pl.BlockSpec((hidden_dim, out_pad), lambda i: (0, 0)),    # resident
            pl.BlockSpec((1, out_pad), lambda i: (0, 0)),             # resident
        ],
        out_specs=pl.BlockSpec((tb, out_pad), lambda i: (i, 0)),
        compiler_params=pltpu.CompilerParams(
            # Batch steps are independent -> lets Mosaic shard across v7x's
            # 2 TensorCores; harmless no-op on v5e/v6e.
            dimension_semantics=("parallel",),
            vmem_limit_bytes=min(64 * 1024 * 1024,
                                 max(4 * 1024 * 1024, 4 * vmem_bytes(tb))),
        ),
        cost_estimate=pl.CostEstimate(
            flops=flops, transcendentals=0, bytes_accessed=bytes_accessed),
    )(state_p, w1, b1, w2p, b2p)

    return out_p[:B, :output_dim]


def init_policy_params(key, input_dim, hidden_dim, output_dim):
    """Deterministic init mirroring nn.Linear default U(-1/sqrt(fan_in), +)."""
    k1, k2, k3, k4 = jax.random.split(key, 4)
    bound1 = 1.0 / (input_dim ** 0.5)
    bound2 = 1.0 / (hidden_dim ** 0.5)
    # Stored as (in_features, out_features) == PyTorch weight.T
    w1 = jax.random.uniform(k1, (input_dim, hidden_dim), jnp.float32, -bound1, bound1)
    b1 = jax.random.uniform(k2, (1, hidden_dim), jnp.float32, -bound1, bound1)
    w2 = jax.random.uniform(k3, (hidden_dim, output_dim), jnp.float32, -bound2, bound2)
    b2 = jax.random.uniform(k4, (1, output_dim), jnp.float32, -bound2, bound2)
    return w1, b1, w2, b2


def _reference(state, w1, b1, w2, b2):
    return jnp.maximum(state @ w1 + b1, 0.0) @ w2 + b2


if __name__ == "__main__":
    input_dim, hidden_dim, output_dim = 16, 32, 8
    key = jax.random.PRNGKey(0)
    k_params, k_small, k_big = jax.random.split(key, 3)
    w1, b1, w2, b2 = init_policy_params(k_params, input_dim, hidden_dim, output_dim)

    # 1) Tiny RL-style batch (single grid step, block == full array).
    state_small = jax.random.normal(k_small, (4, input_dim), jnp.float32)
    out_small = jax.block_until_ready(policy_forward(state_small, w1, b1, w2, b2))
    ref_small = _reference(state_small, w1, b1, w2, b2)
    assert out_small.shape == (4, output_dim)
    assert jnp.allclose(out_small, ref_small, atol=1e-5, rtol=1e-5)

    # 2) Larger batch to exercise the batch-tiled grid path (with padding).
    state_big = jax.random.normal(k_big, (1000, input_dim), jnp.float32)
    out_big = jax.block_until_ready(
        policy_forward(state_big, w1, b1, w2, b2, block_b=256))
    ref_big = _reference(state_big, w1, b1, w2, b2)
    assert out_big.shape == (1000, output_dim)
    assert jnp.allclose(out_big, ref_big, atol=1e-4, rtol=1e-4)

    print("KERNEL_OK")
</pallas_src>

<mosaic_0001>
module attributes {stable_mosaic.version = 11 : i64} {
  func.func @_policy_mlp_kernel(%arg0: i32, %arg1: memref<4x16xf32, #tpu.memory_space<vmem>>, %arg2: memref<16x32xf32, #tpu.memory_space<vmem>>, %arg3: memref<1x32xf32, #tpu.memory_space<vmem>>, %arg4: memref<32x128xf32, #tpu.memory_space<vmem>>, %arg5: memref<1x128xf32, #tpu.memory_space<vmem>>, %arg6: memref<4x128xf32, #tpu.memory_space<vmem>>) attributes {dimension_semantics = [#tpu.dimension_semantics<parallel>], iteration_bounds = array<i64: 1>, scalar_prefetch = 0 : i64, scratch_operands = 0 : i64, tpu.core_type = #tpu.core_type<tc>, window_params = [{transform_indices = @transform_0, window_bounds = array<i64: 4, 16>}, {pipeline_mode = #tpu.pipeline_mode<synchronous>, transform_indices = @transform_1, window_bounds = array<i64: 16, 32>}, {pipeline_mode = #tpu.pipeline_mode<synchronous>, transform_indices = @transform_2, window_bounds = array<i64: 1, 32>}, {pipeline_mode = #tpu.pipeline_mode<synchronous>, transform_indices = @transform_3, window_bounds = array<i64: 32, 128>}, {pipeline_mode = #tpu.pipeline_mode<synchronous>, transform_indices = @transform_4, window_bounds = array<i64: 1, 128>}, {transform_indices = @transform_5, window_bounds = array<i64: 4, 128>}]} {
    %c0 = arith.constant 0 : index
    %c0_0 = arith.constant 0 : index
    %0 = vector.load %arg1[%c0, %c0_0] : memref<4x16xf32, #tpu.memory_space<vmem>>, vector<4x16xf32>
    %c0_1 = arith.constant 0 : index
    %c0_2 = arith.constant 0 : index
    %1 = vector.load %arg2[%c0_1, %c0_2] : memref<16x32xf32, #tpu.memory_space<vmem>>, vector<16x32xf32>
    %cst = arith.constant dense<0.000000e+00> : vector<4x32xf32>
    %2 = tpu.matmul %0, %1, %cst {dimension_numbers = #tpu.dot_dimension_numbers<[1], [0], [0], [1], [0, 0, 1, 1], [], []>} : vector<4x16xf32>, vector<16x32xf32>, vector<4x32xf32> -> vector<4x32xf32>
    %c0_3 = arith.constant 0 : index
    %c0_4 = arith.constant 0 : index
    %3 = vector.load %arg3[%c0_3, %c0_4] : memref<1x32xf32, #tpu.memory_space<vmem>>, vector<1x32xf32>
    %4 = vector.broadcast %3 : vector<1x32xf32> to vector<4x32xf32>
    %5 = arith.addf %2, %4 : vector<4x32xf32>
    %cst_5 = arith.constant 0.000000e+00 : f32
    %6 = vector.broadcast %cst_5 : f32 to vector<4x32xf32>
    %7 = arith.maximumf %5, %6 : vector<4x32xf32>
    %c0_6 = arith.constant 0 : index
    %c0_7 = arith.constant 0 : index
    %8 = vector.load %arg4[%c0_6, %c0_7] : memref<32x128xf32, #tpu.memory_space<vmem>>, vector<32x128xf32>
    %cst_8 = arith.constant dense<0.000000e+00> : vector<4x128xf32>
    %9 = tpu.matmul %7, %8, %cst_8 {dimension_numbers = #tpu.dot_dimension_numbers<[1], [0], [0], [1], [0, 0, 1, 1], [], []>} : vector<4x32xf32>, vector<32x128xf32>, vector<4x128xf32> -> vector<4x128xf32>
    %c0_9 = arith.constant 0 : index
    %c0_10 = arith.constant 0 : index
    %10 = vector.load %arg5[%c0_9, %c0_10] : memref<1x128xf32, #tpu.memory_space<vmem>>, vector<1x128xf32>
    %11 = vector.broadcast %10 : vector<1x128xf32> to vector<4x128xf32>
    %12 = arith.addf %9, %11 : vector<4x128xf32>
    %c0_11 = arith.constant 0 : index
    %c0_12 = arith.constant 0 : index
    %13 = vector.load %arg6[%c0_11, %c0_12] : memref<4x128xf32, #tpu.memory_space<vmem>>, vector<4x128xf32>
    tpu.vector_store %arg6[%c0_11, %c0_12], %12 {strides = array<i32>} : memref<4x128xf32, #tpu.memory_space<vmem>>, vector<4x128xf32>,
    return
  }
  func.func @transform_0(%arg0: i32) -> (i32, i32) {
    %c0_i32 = arith.constant 0 : i32
    %c0_i32_0 = arith.constant 0 : i32
    return %arg0, %c0_i32 : i32, i32
  }
  func.func @transform_1(%arg0: i32) -> (i32, i32) {
    %c0_i32 = arith.constant 0 : i32
    %c0_i32_0 = arith.constant 0 : i32
    %c0_i32_1 = arith.constant 0 : i32
    return %c0_i32, %c0_i32_0 : i32, i32
  }
  func.func @transform_2(%arg0: i32) -> (i32, i32) {
    %c0_i32 = arith.constant 0 : i32
    %c0_i32_0 = arith.constant 0 : i32
    %c0_i32_1 = arith.constant 0 : i32
    return %c0_i32, %c0_i32_0 : i32, i32
  }
  func.func @transform_3(%arg0: i32) -> (i32, i32) {
    %c0_i32 = arith.constant 0 : i32
    %c0_i32_0 = arith.constant 0 : i32
    %c0_i32_1 = arith.constant 0 : i32
    return %c0_i32, %c0_i32_0 : i32, i32
  }
  func.func @transform_4(%arg0: i32) -> (i32, i32) {
    %c0_i32 = arith.constant 0 : i32
    %c0_i32_0 = arith.constant 0 : i32
    %c0_i32_1 = arith.constant 0 : i32
    return %c0_i32, %c0_i32_0 : i32, i32
  }
  func.func @transform_5(%arg0: i32) -> (i32, i32) {
    %c0_i32 = arith.constant 0 : i32
    %c0_i32_0 = arith.constant 0 : i32
    return %arg0, %c0_i32 : i32, i32
  }
}

</mosaic_0001>

<llo_original>
// kernel: tpu_custom_call.1
$region0: #{tpu_custom_call.1}
  #allocation0 [shape = 'u32[]', space=smem, size = 0x4, offset = 0x4, fixed_abs, tag = 'smem constant byte address 0x4 - core index']
  #allocation1 [shape = 'u32[72,128]{1,0:T(1,128)}', space=vmem, size = 0x9000, scoped, tag = 'internal scratch']
  %s0 = inlined_call_operand.hbm [shape: f32[4,16], index: 0, kind: input, shape index: {}]
  %s1 = inlined_call_operand.hbm [shape: f32[16,32], index: 1, kind: input, shape index: {}]
  %s2 = inlined_call_operand.vmem [shape: f32[1,32], index: 2, kind: input, shape index: {}]
  %s3 = inlined_call_operand.hbm [shape: f32[32,128], index: 3, kind: input, shape index: {}]
  %s4 = inlined_call_operand.vmem [shape: f32[1,128], index: 4, kind: input, shape index: {}]
  %s5 = inlined_call_operand.hbm [shape: f32[4,128], index: 5, kind: output, shape index: {}]
  %s6 = sld [smem:[#allocation0]]
  $region42: #{tpu_custom_call.1} parent=0
    _
  %s8 = ssub.s32 1, %s6
  %s9 = scalar_select 0, %s8, %s6
  $region1: #{tpu_custom_call.1} parent=0
    #allocation2 [shape = 'u8[2048]{0}', space=vmem, size = 0x800, scoped, tag = 'input window, operand 0, single buffered']
    #allocation3 [shape = 's32[1]{0}', space=sflag, size = 0x4, scoped, tag = 'scoped memory for tpu_custom_call.1']
    #allocation4 [shape = 's32[1]{0}', space=sflag, size = 0x4, scoped, tag = 'scoped memory for tpu_custom_call.1']
    #allocation5 [shape = 'u8[8192]{0}', space=vmem, size = 0x2000, scoped, tag = 'input window, operand 1, single buffered']
    #allocation6 [shape = 's32[1]{0}', space=sflag, size = 0x4, scoped, tag = 'scoped memory for tpu_custom_call.1']
    #allocation7 [shape = 'u8[16384]{0}', space=vmem, size = 0x4000, scoped, tag = 'input window, operand 3, single buffered']
    #allocation8 [shape = 'u8[2048]{0}', space=vmem, size = 0x800, scoped, tag = 'output window, operand 0, single buffered']
    %10 = vsyncpa [#allocation3], 0
    %11 = vsyncpa [#allocation6], 0
    %12 = vsyncpa [#allocation4], 0
    // Predicated region
    $region2: #{tpu_custom_call.1} parent=1 // pred_check
      _
    $region3: #{tpu_custom_call.1} parent=1 // pred_check_branch
      %14 = sbr.rel (0) target = $region5
    $region4: #{tpu_custom_call.1} parent=1 // pred_region
      %16 = vsyncadd [#allocation3], 0
      %s18 = sshll.u32 %s0, 4
      %s19 = int_to_ptr.hbm [resolvable:$true] %s18
      %s20 = sshll.u32 [#allocation2], 4
      %s21 = int_to_ptr.vmem [resolvable:$true] %s20
      %23 = dma.hbm_to_vmem [thread:$0]  %s19, 64, %s21, [#allocation3]
    $region5: #{tpu_custom_call.1} parent=1 // pred_fallthru
      _
    // Predicated region
    $region6: #{tpu_custom_call.1} parent=1 // pred_check
      _
    $region7: #{tpu_custom_call.1} parent=1 // pred_check_branch
      %25 = sbr.rel (0) target = $region9
    $region8: #{tpu_custom_call.1} parent=1 // pred_region
      %27 = vsyncadd [#allocation6], 0
      %s28 = sshll.u32 %s1, 4
      %s29 = int_to_ptr.hbm [resolvable:$true] %s28
      %s30 = sshll.u32 [#allocation5], 4
      %s31 = int_to_ptr.vmem [resolvable:$true] %s30
      %36 = dma.hbm_to_vmem [thread:$0]  %s29, 256, %s31, [#allocation6], 128, 128, 8
    $region9: #{tpu_custom_call.1} parent=1 // pred_fallthru
      _
    // Predicated region
    $region10: #{tpu_custom_call.1} parent=1 // pred_check
      _
    $region11: #{tpu_custom_call.1} parent=1 // pred_check_branch
      %38 = sbr.rel (0) target = $region13
    $region12: #{tpu_custom_call.1} parent=1 // pred_region
      _
    $region13: #{tpu_custom_call.1} parent=1 // pred_fallthru
      _
    // Predicated region
    $region14: #{tpu_custom_call.1} parent=1 // pred_check
      _
    $region15: #{tpu_custom_call.1} parent=1 // pred_check_branch
      %40 = sbr.rel (0) target = $region17
    $region16: #{tpu_custom_call.1} parent=1 // pred_region
      %42 = vsyncadd [#allocation6], 0
      %s43 = sshll.u32 %s3, 4
      %s44 = int_to_ptr.hbm [resolvable:$true] %s43
      %s45 = sshll.u32 [#allocation7], 4
      %s46 = int_to_ptr.vmem [resolvable:$true] %s45
      %51 = dma.hbm_to_vmem [thread:$0]  %s44, 512, %s46, [#allocation6], 128, 128, 8
    $region17: #{tpu_custom_call.1} parent=1 // pred_fallthru
      _
    // Predicated region
    $region18: #{tpu_custom_call.1} parent=1 // pred_check
      _
    $region19: #{tpu_custom_call.1} parent=1 // pred_check_branch
      %53 = sbr.rel (0) target = $region21
    $region20: #{tpu_custom_call.1} parent=1 // pred_region
      _
    $region21: #{tpu_custom_call.1} parent=1 // pred_fallthru
      _
    // Predicated region
    $region22: #{tpu_custom_call.1} parent=1 // pred_check
      _
    $region23: #{tpu_custom_call.1} parent=1 // pred_check_branch
      %55 = sbr.rel (0) target = $region25
    $region24: #{tpu_custom_call.1} parent=1 // pred_region
      %57 = dma.done [#allocation3], 64
    $region25: #{tpu_custom_call.1} parent=1 // pred_fallthru
      _
    // Predicated region
    $region26: #{tpu_custom_call.1} parent=1 // pred_check
      _
    $region27: #{tpu_custom_call.1} parent=1 // pred_check_branch
      %59 = sbr.rel (0) target = $region29
    $region28: #{tpu_custom_call.1} parent=1 // pred_region
      %61 = dma.done [#allocation6], 256
    $region29: #{tpu_custom_call.1} parent=1 // pred_fallthru
      _
    // Predicated region
    $region30: #{tpu_custom_call.1} parent=1 // pred_check
      _
    $region31: #{tpu_custom_call.1} parent=1 // pred_check_branch
      %63 = sbr.rel (0) target = $region33
    $region32: #{tpu_custom_call.1} parent=1 // pred_region
      %65 = dma.done [#allocation6], 512
    $region33: #{tpu_custom_call.1} parent=1 // pred_fallthru
      _
    %v66 = vld [vmem:[#allocation2] sm:$0xf]
    %v67 = vld [vmem:[#allocation5] sm:$0xff]
    %v68 = vld [vmem:[#allocation5 + $0x8] sm:$0xff]
    %v69 = vld [vmem:[%s2] sm:$0x1]
    %v71 = vperm.slane %v69, 0
    %vm73 = vcmask 130048
    %v75 = vsel %vm73, %v66, 0
    %77 = vmatpush.msra.mxu0 0.0
    %78 = vmatpush.msra.mxu0 0.0
    %79 = vmatpush.msra.mxu0 0.0
    %80 = vmatpush.msra.mxu0 0.0
    %81 = vmatpush.msra.mxu0 0.0
    %82 = vmatpush.msra.mxu0 0.0
    %83 = vmatpush.msra.mxu0 0.0
    %84 = vmatpush.msra.mxu0 0.0
    %85 = vmatpush.msra.mxu0 0.0
    %86 = vmatpush.msra.mxu0 0.0
    %87 = vmatpush.msra.mxu0 0.0
    %88 = vmatpush.msra.mxu0 0.0
    %89 = vmatpush.msra.mxu0 0.0
    %90 = vmatpush.msra.mxu0 0.0
    %91 = vmatpush.msra.mxu0 %v68
    %92 = vmatpush.msra.mxu0 %v67
    %93 = vmatmul.f32.gmra.mxu0 %v75
    %v94 = vpop.f32.mrf.mxu0
    %v95 = vadd.f32 %v71, %v94
    %96 = vdwg.mxu0
    %v97 = vmax.f32 %v95, 0.0
    %v98 = vld [vmem:[#allocation7] sm:$0xff]
    %v99 = vld [vmem:[#allocation7 + $0x8] sm:$0xff]
    %v100 = vld [vmem:[#allocation7 + $0x10] sm:$0xff]
    %v101 = vld [vmem:[#allocation7 + $0x18] sm:$0xff]
    %v102 = vld [vmem:[%s4] sm:$0x1]
    %v104 = vperm.slane %v102, 0
    %vm106 = vcmask 261120
    %v108 = vsel %vm106, %v97, 0
    %110 = vmatpush.msra.mxu0 0.0
    %111 = vmatpush.msra.mxu0 0.0
    %112 = vmatpush.msra.mxu0 0.0
    %113 = vmatpush.msra.mxu0 0.0
    %114 = vmatpush.msra.mxu0 0.0
    %115 = vmatpush.msra.mxu0 0.0
    %116 = vmatpush.msra.mxu0 0.0
    %117 = vmatpush.msra.mxu0 0.0
    %118 = vmatpush.msra.mxu0 0.0
    %119 = vmatpush.msra.mxu0 0.0
    %120 = vmatpush.msra.mxu0 0.0
    %121 = vmatpush.msra.mxu0 0.0
    %122 = vmatpush.msra.mxu0 %v101
    %123 = vmatpush.msra.mxu0 %v100
    %124 = vmatpush.msra.mxu0 %v99
    %125 = vmatpush.msra.mxu0 %v98
    %126 = vmatmul.f32.gmra.mxu0 %v108
    %v127 = vpop.f32.mrf.mxu0
    %v128 = vadd.f32 %v104, %v127
    %129 = vdwg.mxu0
    %130 = vst [vmem:[#allocation8] sm:$0xf] %v128
    // Predicated region
    $region34: #{tpu_custom_call.1} parent=1 // pred_check
      _
    $region35: #{tpu_custom_call.1} parent=1 // pred_check_branch
      %132 = sbr.rel (0) target = $region37
    $region36: #{tpu_custom_call.1} parent=1 // pred_region
      %134 = vsyncadd [#allocation4], 0
      %s136 = sshll.u32 [#allocation8], 4
      %s137 = int_to_ptr.vmem [resolvable:$true] %s136
      %s138 = sshll.u32 %s5, 4
      %s139 = int_to_ptr.hbm [resolvable:$true] %s138
      %141 = dma.vmem_to_hbm [thread:$0]  %s137, 64, %s139, [#allocation4]
    $region37: #{tpu_custom_call.1} parent=1 // pred_fallthru
      _
    // Predicated region
    $region38: #{tpu_custom_call.1} parent=1 // pred_check
      _
    $region39: #{tpu_custom_call.1} parent=1 // pred_check_branch
      %143 = sbr.rel (0) target = $region41
    $region40: #{tpu_custom_call.1} parent=1 // pred_region
      %145 = dma.done [#allocation4], 64
    $region41: #{tpu_custom_call.1} parent=1 // pred_fallthru
      _
    %146 = vsyncpa [#allocation3], 1
    %147 = vsyncpa [#allocation6], 1
    %148 = vsyncpa [#allocation4], 1

</llo_original>
